<compile_context>
chip_gen: v7x
topology: tpu7x:2x2x1
jax: 0.10.0
libtpu: 0.0.40
codegen_flags: <defaults>
</compile_context>

<pallas_src>
import functools

import jax
import jax.numpy as jnp
from jax.experimental import pallas as pl
from jax.experimental.pallas import tpu as pltpu


def _round_up(x, m):
    return (x + m - 1) // m * m


def _l2_normalize_rows(x, eps=1e-12):
    # torch.nn.functional.normalize(p=2, dim=1): x / max(||x||_2, eps)
    n = jnp.sqrt(jnp.sum(x * x, axis=1, keepdims=True))
    return x / jnp.maximum(n, eps)


def _knn_kernel(x_ref, tf_ref, lab_ref, o_ref, topv_ref, topl_ref, *,
                nb_knn, T, key_shift, n_total, n_padded):
    # x_ref:   (TB, D)  f32   test-feature tile (constant across the N axis)
    # tf_ref:  (D, NT)  bf16  streamed tile of normalized train features
    # lab_ref: (1, NT)  i32   streamed tile of train labels
    # o_ref:   (TB, Cpad) f32 per-class scores (written on the last N tile)
    # topv_ref/topl_ref: (TB, 128) running top-K values / labels (scratch)
    j = pl.program_id(1)
    tb, _ = x_ref.shape
    nt = tf_ref.shape[1]
    k_lanes = topv_ref.shape[1]          # 128 (>= nb_knn)
    ckey = 1 << key_shift

    @pl.when(j == 0)
    def _init():
        topv_ref[...] = jnp.full((tb, k_lanes), -jnp.inf, jnp.float32)
        topl_ref[...] = jnp.zeros((tb, k_lanes), jnp.int32)

    # ---- forward: L2-normalize the test tile (f32, torch-exact formula). ----
    x = x_ref[...]
    nrm = jnp.sqrt(jnp.sum(x * x, axis=1, keepdims=True))
    xn = x / jnp.maximum(nrm, 1e-12)

    # ---- similarity tile on the MXU: bf16 inputs, f32 accumulation. ----
    sim = jnp.dot(xn.astype(jnp.bfloat16), tf_ref[...],
                  preferred_element_type=jnp.float32)            # (TB, NT)

    if n_padded != n_total:
        # Mask padded train columns so they are never selected.
        col = j * nt + jax.lax.broadcasted_iota(jnp.int32, (tb, nt), 1)
        sim = jnp.where(col < n_total, sim, -jnp.inf)

    # ---- candidate set = [running top-K (128 lanes) | this tile's sims]. ----
    labs_tile = jnp.broadcast_to(lab_ref[...].astype(jnp.float32), (tb, nt))
    vals = jnp.concatenate([topv_ref[...], sim], axis=1)                    # (TB, W)
    labs = jnp.concatenate([topl_ref[...].astype(jnp.float32), labs_tile], axis=1)
    w_width = k_lanes + nt
    lane = jax.lax.broadcasted_iota(jnp.int32, (tb, w_width), 1)
    # Packed key = lane_index * 2^key_shift + label; exact in f32 (< 2^24).
    keys = lane.astype(jnp.float32) * float(ckey) + labs
    big = jnp.float32(1 << 25)

    lane128 = jax.lax.broadcasted_iota(jnp.int32, (tb, k_lanes), 1)
    newv = jnp.full((tb, k_lanes), -jnp.inf, jnp.float32)
    newl = jnp.zeros((tb, k_lanes), jnp.int32)

    # Online top-K merge: K is small & static -> unrolled.  2 XLU reductions
    # per k (value max + packed-key min), lowest-index tie-break.
    for k in range(nb_knn):
        m = jnp.max(vals, axis=1, keepdims=True)                            # (TB, 1)
        wk = jnp.min(jnp.where(vals == m, keys, big), axis=1, keepdims=True)
        wk_i = wk.astype(jnp.int32)
        idx = wk_i >> key_shift
        lab = wk_i & (ckey - 1)
        vals = jnp.where(lane == idx, -jnp.inf, vals)
        newv = jnp.where(lane128 == k, m, newv)
        newl = jnp.where(lane128 == k, lab, newl)

    topv_ref[...] = newv
    topl_ref[...] = newl

    @pl.when(j == pl.num_programs(1) - 1)
    def _finalize():
        # Softmax over the K kept sims (lanes >= K hold -inf -> weight 0).
        logits = newv * (1.0 / T)
        logits = logits - jnp.max(logits, axis=1, keepdims=True)
        e = jnp.exp(logits)
        w = e / jnp.sum(e, axis=1, keepdims=True)
        cpad = o_ref.shape[1]
        class_iota = jax.lax.broadcasted_iota(jnp.int32, (tb, cpad), 1)
        acc = jnp.zeros((tb, cpad), jnp.float32)
        for k in range(nb_knn):
            acc = acc + jnp.where(class_iota == newl[:, k:k + 1],
                                  w[:, k:k + 1], 0.0)
        o_ref[...] = acc


def knn_forward(test_features, train_features, train_labels, *,
                nb_knn=10, T=0.07, num_classes=50, tile_b=128, tile_n=512):
    test_features = jnp.asarray(test_features, jnp.float32)
    train_features = jnp.asarray(train_features, jnp.float32)
    train_labels = jnp.asarray(train_labels, jnp.int32)

    n_train, d = train_features.shape
    b, d2 = test_features.shape
    assert d == d2
    assert 1 <= nb_knn <= min(n_train, 128), "nb_knn must be <= min(N, 128)"
    assert tile_b % 8 == 0 and tile_n % 128 == 0

    # ---- KNN.__init__ (parameter setup, plain-JAX glue) ----
    # normalize(train_features.T, dim=1): normalization over the sample axis
    # of the transposed tensor (exact PyTorch semantics).  Stored as bf16 to
    # halve HBM traffic / VMEM residency of the dominant streamed operand.
    tf = _l2_normalize_rows(jnp.transpose(train_features)).astype(jnp.bfloat16)

    # ---- padding / tiling ----
    cpad = _round_up(num_classes, 128)           # lane-dense output
    tb = min(tile_b, _round_up(b, 8))            # cap the batch tile
    b_pad = _round_up(b, tb)
    nt = min(tile_n, _round_up(n_train, 128))    # streamed train-column tile
    n_pad = _round_up(n_train, nt)

    key_shift = max(1, (num_classes - 1).bit_length())
    assert (128 + nt) << key_shift < (1 << 24), \
        "packed (lane, label) key exceeds the f32 exact-integer range"

    tf = jnp.pad(tf, ((0, 0), (0, n_pad - n_train)))
    labels = jnp.pad(train_labels, (0, n_pad - n_train)).reshape(1, n_pad)
    x = jnp.pad(test_features, ((0, b_pad - b), (0, 0)))

    kernel = functools.partial(
        _knn_kernel, nb_knn=nb_knn, T=T, key_shift=key_shift,
        n_total=n_train, n_padded=n_pad)

    out = pl.pallas_call(
        kernel,
        out_shape=jax.ShapeDtypeStruct((b_pad, cpad), jnp.float32),
        grid=(b_pad // tb, n_pad // nt),
        in_specs=[
            pl.BlockSpec((tb, d), lambda i, j: (i, 0)),      # test tile
            pl.BlockSpec((d, nt), lambda i, j: (0, j)),      # streamed train cols
            pl.BlockSpec((1, nt), lambda i, j: (0, j)),      # streamed labels
        ],
        out_specs=pl.BlockSpec((tb, cpad), lambda i, j: (i, 0)),
        scratch_shapes=[
            pltpu.VMEM((tb, 128), jnp.float32),   # running top-K values
            pltpu.VMEM((tb, 128), jnp.int32),     # running top-K labels
        ],
        compiler_params=pltpu.CompilerParams(
            dimension_semantics=("parallel", "arbitrary"),
            vmem_limit_bytes=48 * 1024 * 1024),
    )(x, tf, labels)

    return out[:b, :num_classes]


if __name__ == "__main__":
    key = jax.random.PRNGKey(0)
    k1, k2, k3 = jax.random.split(key, 3)

    # Small shapes; N_train not a multiple of 128 so padding + masking and the
    # multi-tile online top-K merge (tile_n=128 -> 2 N-tiles) are exercised.
    N_train, D, B = 200, 32, 8
    nb_knn, T, num_classes = 10, 0.07, 50

    train_features = jax.random.normal(k1, (N_train, D), jnp.float32)
    train_labels = jax.random.randint(k2, (N_train,), 0, num_classes, jnp.int32)
    test_features = jax.random.normal(k3, (B, D), jnp.float32)

    out = knn_forward(test_features, train_features, train_labels,
                      nb_knn=nb_knn, T=T, num_classes=num_classes,
                      tile_b=128, tile_n=128)
    out = jax.block_until_ready(out)

    # Plain-JAX reference of the same forward pass (same bf16 similarity path).
    tf_ref = _l2_normalize_rows(jnp.transpose(train_features)).astype(jnp.bfloat16)
    xn_ref = _l2_normalize_rows(test_features).astype(jnp.bfloat16)
    sim_ref = jnp.dot(xn_ref, tf_ref, preferred_element_type=jnp.float32)
    tv, ti = jax.lax.top_k(sim_ref, nb_knn)
    nb_labels = train_labels[ti]
    w_ref = jax.nn.softmax(tv / T, axis=1)
    ref = jnp.sum(jax.nn.one_hot(nb_labels, num_classes, dtype=jnp.float32)
                  * w_ref[:, :, None], axis=1)

    assert out.shape == (B, num_classes)
    assert jnp.allclose(jnp.sum(out, axis=1), 1.0, atol=1e-3)
    assert jnp.allclose(out, ref, atol=1e-2), (out, ref)
    print("KERNEL_OK")
</pallas_src>

<mosaic_0001>
module attributes {stable_mosaic.version = 11 : i64} {
  func.func @_knn_kernel(%arg0: i32, %arg1: i32, %arg2: memref<8x32xf32, #tpu.memory_space<vmem>>, %arg3: memref<32x128xbf16, #tpu.memory_space<vmem>>, %arg4: memref<1x128xi32, #tpu.memory_space<vmem>>, %arg5: memref<8x128xf32, #tpu.memory_space<vmem>>, %arg6: memref<8x128xf32, #tpu.memory_space<vmem>>, %arg7: memref<8x128xi32, #tpu.memory_space<vmem>>) attributes {dimension_semantics = [#tpu.dimension_semantics<parallel>, #tpu.dimension_semantics<arbitrary>], iteration_bounds = array<i64: 1, 2>, scalar_prefetch = 0 : i64, scratch_operands = 2 : i64, tpu.core_type = #tpu.core_type<tc>, window_params = [{transform_indices = @transform_0, window_bounds = array<i64: 8, 32>}, {transform_indices = @transform_1, window_bounds = array<i64: 32, 128>}, {transform_indices = @transform_2, window_bounds = array<i64: 1, 128>}, {transform_indices = @transform_3, window_bounds = array<i64: 8, 128>}]} {
    %c0_i32 = arith.constant 0 : i32
    %0 = arith.cmpi eq, %arg1, %c0_i32 : i32
    %1 = arith.extui %0 : i1 to i32
    %c0_i32_0 = arith.constant 0 : i32
    %2 = arith.cmpi ne, %1, %c0_i32_0 : i32
    scf.if %2 {
      %cst_90 = arith.constant 0xFF800000 : f32
      %309 = vector.broadcast %cst_90 : f32 to vector<8x128xf32>
      %c0_91 = arith.constant 0 : index
      %c0_92 = arith.constant 0 : index
      %310 = vector.load %arg6[%c0_91, %c0_92] : memref<8x128xf32, #tpu.memory_space<vmem>>, vector<8x128xf32>
      tpu.vector_store %arg6[%c0_91, %c0_92], %309 {strides = array<i32>} : memref<8x128xf32, #tpu.memory_space<vmem>>, vector<8x128xf32>,
      %c0_i32_93 = arith.constant 0 : i32
      %311 = vector.broadcast %c0_i32_93 : i32 to vector<8x128xi32>
      %c0_94 = arith.constant 0 : index
      %c0_95 = arith.constant 0 : index
      %312 = vector.load %arg7[%c0_94, %c0_95] : memref<8x128xi32, #tpu.memory_space<vmem>>, vector<8x128xi32>
      tpu.vector_store %arg7[%c0_94, %c0_95], %311 {strides = array<i32>} : memref<8x128xi32, #tpu.memory_space<vmem>>, vector<8x128xi32>,
    } else {
    }
    %c0 = arith.constant 0 : index
    %c0_1 = arith.constant 0 : index
    %3 = vector.load %arg2[%c0, %c0_1] : memref<8x32xf32, #tpu.memory_space<vmem>>, vector<8x32xf32>
    %4 = arith.mulf %3, %3 : vector<8x32xf32>
    %cst = arith.constant dense<0.000000e+00> : vector<8xf32>
    %5 = vector.multi_reduction <add>, %4, %cst [1] : vector<8x32xf32> to vector<8xf32>
    %6 = vector.shape_cast %5 : vector<8xf32> to vector<8x1xf32>
    %7 = math.sqrt %6 : vector<8x1xf32>
    %cst_2 = arith.constant 9.99999996E-13 : f32
    %8 = vector.broadcast %cst_2 : f32 to vector<8x1xf32>
    %9 = arith.maximumf %7, %8 : vector<8x1xf32>
    %10 = vector.broadcast %9 : vector<8x1xf32> to vector<8x32xf32>
    %11 = arith.divf %3, %10 : vector<8x32xf32>
    %12 = arith.truncf %11 : vector<8x32xf32> to vector<8x32xbf16>
    %c0_3 = arith.constant 0 : index
    %c0_4 = arith.constant 0 : index
    %13 = vector.load %arg3[%c0_3, %c0_4] : memref<32x128xbf16, #tpu.memory_space<vmem>>, vector<32x128xbf16>
    %cst_5 = arith.constant dense<0.000000e+00> : vector<8x128xf32>
    %14 = tpu.matmul %12, %13, %cst_5 {dimension_numbers = #tpu.dot_dimension_numbers<[1], [0], [0], [1], [0, 0, 1, 1], [], []>} : vector<8x32xbf16>, vector<32x128xbf16>, vector<8x128xf32> -> vector<8x128xf32>
    %c128_i32 = arith.constant 128 : i32
    %15 = arith.muli %arg1, %c128_i32 : i32
    %16 = tpu.iota {dimensions = array<i32: 1>} : vector<8x128xi32>
    %17 = vector.broadcast %15 : i32 to vector<8x128xi32>
    %18 = arith.addi %17, %16 : vector<8x128xi32>
    %c200_i32 = arith.constant 200 : i32
    %19 = vector.broadcast %c200_i32 : i32 to vector<8x128xi32>
    %20 = arith.cmpi slt, %18, %19 : vector<8x128xi32>
    %cst_6 = arith.constant 0xFF800000 : f32
    %21 = vector.broadcast %cst_6 : f32 to vector<8x128xf32>
    %22 = arith.select %20, %14, %21 : vector<8x128xi1>, vector<8x128xf32>
    %c0_7 = arith.constant 0 : index
    %c0_8 = arith.constant 0 : index
    %23 = vector.load %arg4[%c0_7, %c0_8] : memref<1x128xi32, #tpu.memory_space<vmem>>, vector<1x128xi32>
    %24 = arith.sitofp %23 : vector<1x128xi32> to vector<1x128xf32>
    %25 = vector.shape_cast %24 : vector<1x128xf32> to vector<1x128xf32>
    %26 = vector.broadcast %25 : vector<1x128xf32> to vector<8x128xf32>
    %c0_9 = arith.constant 0 : index
    %c0_10 = arith.constant 0 : index
    %27 = vector.load %arg6[%c0_9, %c0_10] : memref<8x128xf32, #tpu.memory_space<vmem>>, vector<8x128xf32>
    %28 = tpu.concatenate %27, %22 in 1 : vector<8x128xf32>, vector<8x128xf32> -> vector<8x256xf32>
    %c0_11 = arith.constant 0 : index
    %c0_12 = arith.constant 0 : index
    %29 = vector.load %arg7[%c0_11, %c0_12] : memref<8x128xi32, #tpu.memory_space<vmem>>, vector<8x128xi32>
    %30 = arith.sitofp %29 : vector<8x128xi32> to vector<8x128xf32>
    %31 = tpu.concatenate %30, %26 in 1 : vector<8x128xf32>, vector<8x128xf32> -> vector<8x256xf32>
    %32 = tpu.iota {dimensions = array<i32: 1>} : vector<8x256xi32>
    %33 = arith.sitofp %32 : vector<8x256xi32> to vector<8x256xf32>
    %cst_13 = arith.constant 6.400000e+01 : f32
    %34 = vector.broadcast %cst_13 : f32 to vector<8x256xf32>
    %35 = arith.mulf %33, %34 : vector<8x256xf32>
    %36 = arith.addf %35, %31 : vector<8x256xf32>
    %37 = tpu.iota {dimensions = array<i32: 1>} : vector<8x128xi32>
    %cst_14 = arith.constant 0xFF800000 : f32
    %38 = vector.broadcast %cst_14 : f32 to vector<8x128xf32>
    %c0_i32_15 = arith.constant 0 : i32
    %39 = vector.broadcast %c0_i32_15 : i32 to vector<8x128xi32>
    %cst_16 = arith.constant dense<0xFF800000> : vector<8xf32>
    %40 = vector.multi_reduction <maximumf>, %28, %cst_16 [1] : vector<8x256xf32> to vector<8xf32>
    %41 = vector.shape_cast %40 : vector<8xf32> to vector<8x1xf32>
    %42 = vector.broadcast %41 : vector<8x1xf32> to vector<8x256xf32>
    %43 = arith.cmpf oeq, %28, %42 : vector<8x256xf32>
    %cst_17 = arith.constant 0x4C000000 : f32
    %44 = vector.broadcast %cst_17 : f32 to vector<8x256xf32>
    %45 = arith.select %43, %36, %44 : vector<8x256xi1>, vector<8x256xf32>
    %cst_18 = arith.constant dense<0x7F800000> : vector<8xf32>
    %46 = vector.multi_reduction <minimumf>, %45, %cst_18 [1] : vector<8x256xf32> to vector<8xf32>
    %47 = vector.shape_cast %46 : vector<8xf32> to vector<8x1xf32>
    %48 = arith.fptosi %47 : vector<8x1xf32> to vector<8x1xi32>
    %c6_i32 = arith.constant 6 : i32
    %49 = vector.broadcast %c6_i32 : i32 to vector<8x1xi32>
    %50 = arith.shrsi %48, %49 : vector<8x1xi32>
    %c63_i32 = arith.constant 63 : i32
    %51 = vector.broadcast %c63_i32 : i32 to vector<8x1xi32>
    %52 = arith.andi %48, %51 : vector<8x1xi32>
    %53 = vector.broadcast %50 : vector<8x1xi32> to vector<8x256xi32>
    %54 = arith.cmpi eq, %32, %53 : vector<8x256xi32>
    %cst_19 = arith.constant 0xFF800000 : f32
    %55 = vector.broadcast %cst_19 : f32 to vector<8x256xf32>
    %56 = arith.select %54, %55, %28 : vector<8x256xi1>, vector<8x256xf32>
    %c0_i32_20 = arith.constant 0 : i32
    %57 = vector.broadcast %c0_i32_20 : i32 to vector<8x128xi32>
    %58 = arith.cmpi eq, %37, %57 : vector<8x128xi32>
    %59 = vector.shape_cast %41 : vector<8x1xf32> to vector<8x1xf32>
    %60 = vector.broadcast %59 : vector<8x1xf32> to vector<8x128xf32>
    %61 = arith.select %58, %60, %38 : vector<8x128xi1>, vector<8x128xf32>
    %c0_i32_21 = arith.constant 0 : i32
    %62 = vector.broadcast %c0_i32_21 : i32 to vector<8x128xi32>
    %63 = arith.cmpi eq, %37, %62 : vector<8x128xi32>
    %64 = vector.shape_cast %52 : vector<8x1xi32> to vector<8x1xi32>
    %65 = vector.broadcast %64 : vector<8x1xi32> to vector<8x128xi32>
    %66 = arith.select %63, %65, %39 : vector<8x128xi1>, vector<8x128xi32>
    %cst_22 = arith.constant dense<0xFF800000> : vector<8xf32>
    %67 = vector.multi_reduction <maximumf>, %56, %cst_22 [1] : vector<8x256xf32> to vector<8xf32>
    %68 = vector.shape_cast %67 : vector<8xf32> to vector<8x1xf32>
    %69 = vector.broadcast %68 : vector<8x1xf32> to vector<8x256xf32>
    %70 = arith.cmpf oeq, %56, %69 : vector<8x256xf32>
    %cst_23 = arith.constant 0x4C000000 : f32
    %71 = vector.broadcast %cst_23 : f32 to vector<8x256xf32>
    %72 = arith.select %70, %36, %71 : vector<8x256xi1>, vector<8x256xf32>
    %cst_24 = arith.constant dense<0x7F800000> : vector<8xf32>
    %73 = vector.multi_reduction <minimumf>, %72, %cst_24 [1] : vector<8x256xf32> to vector<8xf32>
    %74 = vector.shape_cast %73 : vector<8xf32> to vector<8x1xf32>
    %75 = arith.fptosi %74 : vector<8x1xf32> to vector<8x1xi32>
    %c6_i32_25 = arith.constant 6 : i32
    %76 = vector.broadcast %c6_i32_25 : i32 to vector<8x1xi32>
    %77 = arith.shrsi %75, %76 : vector<8x1xi32>
    %c63_i32_26 = arith.constant 63 : i32
    %78 = vector.broadcast %c63_i32_26 : i32 to vector<8x1xi32>
    %79 = arith.andi %75, %78 : vector<8x1xi32>
    %80 = vector.broadcast %77 : vector<8x1xi32> to vector<8x256xi32>
    %81 = arith.cmpi eq, %32, %80 : vector<8x256xi32>
    %cst_27 = arith.constant 0xFF800000 : f32
    %82 = vector.broadcast %cst_27 : f32 to vector<8x256xf32>
    %83 = arith.select %81, %82, %56 : vector<8x256xi1>, vector<8x256xf32>
    %c1_i32 = arith.constant 1 : i32
    %84 = vector.broadcast %c1_i32 : i32 to vector<8x128xi32>
    %85 = arith.cmpi eq, %37, %84 : vector<8x128xi32>
    %86 = vector.shape_cast %68 : vector<8x1xf32> to vector<8x1xf32>
    %87 = vector.broadcast %86 : vector<8x1xf32> to vector<8x128xf32>
    %88 = arith.select %85, %87, %61 : vector<8x128xi1>, vector<8x128xf32>
    %c1_i32_28 = arith.constant 1 : i32
    %89 = vector.broadcast %c1_i32_28 : i32 to vector<8x128xi32>
    %90 = arith.cmpi eq, %37, %89 : vector<8x128xi32>
    %91 = vector.shape_cast %79 : vector<8x1xi32> to vector<8x1xi32>
    %92 = vector.broadcast %91 : vector<8x1xi32> to vector<8x128xi32>
    %93 = arith.select %90, %92, %66 : vector<8x128xi1>, vector<8x128xi32>
    %cst_29 = arith.constant dense<0xFF800000> : vector<8xf32>
    %94 = vector.multi_reduction <maximumf>, %83, %cst_29 [1] : vector<8x256xf32> to vector<8xf32>
    %95 = vector.shape_cast %94 : vector<8xf32> to vector<8x1xf32>
    %96 = vector.broadcast %95 : vector<8x1xf32> to vector<8x256xf32>
    %97 = arith.cmpf oeq, %83, %96 : vector<8x256xf32>
    %cst_30 = arith.constant 0x4C000000 : f32
    %98 = vector.broadcast %cst_30 : f32 to vector<8x256xf32>
    %99 = arith.select %97, %36, %98 : vector<8x256xi1>, vector<8x256xf32>
    %cst_31 = arith.constant dense<0x7F800000> : vector<8xf32>
    %100 = vector.multi_reduction <minimumf>, %99, %cst_31 [1] : vector<8x256xf32> to vector<8xf32>
    %101 = vector.shape_cast %100 : vector<8xf32> to vector<8x1xf32>
    %102 = arith.fptosi %101 : vector<8x1xf32> to vector<8x1xi32>
    %c6_i32_32 = arith.constant 6 : i32
    %103 = vector.broadcast %c6_i32_32 : i32 to vector<8x1xi32>
    %104 = arith.shrsi %102, %103 : vector<8x1xi32>
    %c63_i32_33 = arith.constant 63 : i32
    %105 = vector.broadcast %c63_i32_33 : i32 to vector<8x1xi32>
    %106 = arith.andi %102, %105 : vector<8x1xi32>
    %107 = vector.broadcast %104 : vector<8x1xi32> to vector<8x256xi32>
    %108 = arith.cmpi eq, %32, %107 : vector<8x256xi32>
    %cst_34 = arith.constant 0xFF800000 : f32
    %109 = vector.broadcast %cst_34 : f32 to vector<8x256xf32>
    %110 = arith.select %108, %109, %83 : vector<8x256xi1>, vector<8x256xf32>
    %c2_i32 = arith.constant 2 : i32
    %111 = vector.broadcast %c2_i32 : i32 to vector<8x128xi32>
    %112 = arith.cmpi eq, %37, %111 : vector<8x128xi32>
    %113 = vector.shape_cast %95 : vector<8x1xf32> to vector<8x1xf32>
    %114 = vector.broadcast %113 : vector<8x1xf32> to vector<8x128xf32>
    %115 = arith.select %112, %114, %88 : vector<8x128xi1>, vector<8x128xf32>
    %c2_i32_35 = arith.constant 2 : i32
    %116 = vector.broadcast %c2_i32_35 : i32 to vector<8x128xi32>
    %117 = arith.cmpi eq, %37, %116 : vector<8x128xi32>
    %118 = vector.shape_cast %106 : vector<8x1xi32> to vector<8x1xi32>
    %119 = vector.broadcast %118 : vector<8x1xi32> to vector<8x128xi32>
    %120 = arith.select %117, %119, %93 : vector<8x128xi1>, vector<8x128xi32>
    %cst_36 = arith.constant dense<0xFF800000> : vector<8xf32>
    %121 = vector.multi_reduction <maximumf>, %110, %cst_36 [1] : vector<8x256xf32> to vector<8xf32>
    %122 = vector.shape_cast %121 : vector<8xf32> to vector<8x1xf32>
    %123 = vector.broadcast %122 : vector<8x1xf32> to vector<8x256xf32>
    %124 = arith.cmpf oeq, %110, %123 : vector<8x256xf32>
    %cst_37 = arith.constant 0x4C000000 : f32
    %125 = vector.broadcast %cst_37 : f32 to vector<8x256xf32>
    %126 = arith.select %124, %36, %125 : vector<8x256xi1>, vector<8x256xf32>
    %cst_38 = arith.constant dense<0x7F800000> : vector<8xf32>
    %127 = vector.multi_reduction <minimumf>, %126, %cst_38 [1] : vector<8x256xf32> to vector<8xf32>
    %128 = vector.shape_cast %127 : vector<8xf32> to vector<8x1xf32>
    %129 = arith.fptosi %128 : vector<8x1xf32> to vector<8x1xi32>
    %c6_i32_39 = arith.constant 6 : i32
    %130 = vector.broadcast %c6_i32_39 : i32 to vector<8x1xi32>
    %131 = arith.shrsi %129, %130 : vector<8x1xi32>
    %c63_i32_40 = arith.constant 63 : i32
    %132 = vector.broadcast %c63_i32_40 : i32 to vector<8x1xi32>
    %133 = arith.andi %129, %132 : vector<8x1xi32>
    %134 = vector.broadcast %131 : vector<8x1xi32> to vector<8x256xi32>
    %135 = arith.cmpi eq, %32, %134 : vector<8x256xi32>
    %cst_41 = arith.constant 0xFF800000 : f32
    %136 = vector.broadcast %cst_41 : f32 to vector<8x256xf32>
    %137 = arith.select %135, %136, %110 : vector<8x256xi1>, vector<8x256xf32>
    %c3_i32 = arith.constant 3 : i32
    %138 = vector.broadcast %c3_i32 : i32 to vector<8x128xi32>
    %139 = arith.cmpi eq, %37, %138 : vector<8x128xi32>
    %140 = vector.shape_cast %122 : vector<8x1xf32> to vector<8x1xf32>
    %141 = vector.broadcast %140 : vector<8x1xf32> to vector<8x128xf32>
    %142 = arith.select %139, %141, %115 : vector<8x128xi1>, vector<8x128xf32>
    %c3_i32_42 = arith.constant 3 : i32
    %143 = vector.broadcast %c3_i32_42 : i32 to vector<8x128xi32>
    %144 = arith.cmpi eq, %37, %143 : vector<8x128xi32>
    %145 = vector.shape_cast %133 : vector<8x1xi32> to vector<8x1xi32>
    %146 = vector.broadcast %145 : vector<8x1xi32> to vector<8x128xi32>
    %147 = arith.select %144, %146, %120 : vector<8x128xi1>, vector<8x128xi32>
    %cst_43 = arith.constant dense<0xFF800000> : vector<8xf32>
    %148 = vector.multi_reduction <maximumf>, %137, %cst_43 [1] : vector<8x256xf32> to vector<8xf32>
    %149 = vector.shape_cast %148 : vector<8xf32> to vector<8x1xf32>
    %150 = vector.broadcast %149 : vector<8x1xf32> to vector<8x256xf32>
    %151 = arith.cmpf oeq, %137, %150 : vector<8x256xf32>
    %cst_44 = arith.constant 0x4C000000 : f32
    %152 = vector.broadcast %cst_44 : f32 to vector<8x256xf32>
    %153 = arith.select %151, %36, %152 : vector<8x256xi1>, vector<8x256xf32>
    %cst_45 = arith.constant dense<0x7F800000> : vector<8xf32>
    %154 = vector.multi_reduction <minimumf>, %153, %cst_45 [1] : vector<8x256xf32> to vector<8xf32>
    %155 = vector.shape_cast %154 : vector<8xf32> to vector<8x1xf32>
    %156 = arith.fptosi %155 : vector<8x1xf32> to vector<8x1xi32>
    %c6_i32_46 = arith.constant 6 : i32
    %157 = vector.broadcast %c6_i32_46 : i32 to vector<8x1xi32>
    %158 = arith.shrsi %156, %157 : vector<8x1xi32>
    %c63_i32_47 = arith.constant 63 : i32
    %159 = vector.broadcast %c63_i32_47 : i32 to vector<8x1xi32>
    %160 = arith.andi %156, %159 : vector<8x1xi32>
    %161 = vector.broadcast %158 : vector<8x1xi32> to vector<8x256xi32>
    %162 = arith.cmpi eq, %32, %161 : vector<8x256xi32>
    %cst_48 = arith.constant 0xFF800000 : f32
    %163 = vector.broadcast %cst_48 : f32 to vector<8x256xf32>
    %164 = arith.select %162, %163, %137 : vector<8x256xi1>, vector<8x256xf32>
    %c4_i32 = arith.constant 4 : i32
    %165 = vector.broadcast %c4_i32 : i32 to vector<8x128xi32>
    %166 = arith.cmpi eq, %37, %165 : vector<8x128xi32>
    %167 = vector.shape_cast %149 : vector<8x1xf32> to vector<8x1xf32>
    %168 = vector.broadcast %167 : vector<8x1xf32> to vector<8x128xf32>
    %169 = arith.select %166, %168, %142 : vector<8x128xi1>, vector<8x128xf32>
    %c4_i32_49 = arith.constant 4 : i32
    %170 = vector.broadcast %c4_i32_49 : i32 to vector<8x128xi32>
    %171 = arith.cmpi eq, %37, %170 : vector<8x128xi32>
    %172 = vector.shape_cast %160 : vector<8x1xi32> to vector<8x1xi32>
    %173 = vector.broadcast %172 : vector<8x1xi32> to vector<8x128xi32>
    %174 = arith.select %171, %173, %147 : vector<8x128xi1>, vector<8x128xi32>
    %cst_50 = arith.constant dense<0xFF800000> : vector<8xf32>
    %175 = vector.multi_reduction <maximumf>, %164, %cst_50 [1] : vector<8x256xf32> to vector<8xf32>
    %176 = vector.shape_cast %175 : vector<8xf32> to vector<8x1xf32>
    %177 = vector.broadcast %176 : vector<8x1xf32> to vector<8x256xf32>
    %178 = arith.cmpf oeq, %164, %177 : vector<8x256xf32>
    %cst_51 = arith.constant 0x4C000000 : f32
    %179 = vector.broadcast %cst_51 : f32 to vector<8x256xf32>
    %180 = arith.select %178, %36, %179 : vector<8x256xi1>, vector<8x256xf32>
    %cst_52 = arith.constant dense<0x7F800000> : vector<8xf32>
    %181 = vector.multi_reduction <minimumf>, %180, %cst_52 [1] : vector<8x256xf32> to vector<8xf32>
    %182 = vector.shape_cast %181 : vector<8xf32> to vector<8x1xf32>
    %183 = arith.fptosi %182 : vector<8x1xf32> to vector<8x1xi32>
    %c6_i32_53 = arith.constant 6 : i32
    %184 = vector.broadcast %c6_i32_53 : i32 to vector<8x1xi32>
    %185 = arith.shrsi %183, %184 : vector<8x1xi32>
    %c63_i32_54 = arith.constant 63 : i32
    %186 = vector.broadcast %c63_i32_54 : i32 to vector<8x1xi32>
    %187 = arith.andi %183, %186 : vector<8x1xi32>
    %188 = vector.broadcast %185 : vector<8x1xi32> to vector<8x256xi32>
    %189 = arith.cmpi eq, %32, %188 : vector<8x256xi32>
    %cst_55 = arith.constant 0xFF800000 : f32
    %190 = vector.broadcast %cst_55 : f32 to vector<8x256xf32>
    %191 = arith.select %189, %190, %164 : vector<8x256xi1>, vector<8x256xf32>
    %c5_i32 = arith.constant 5 : i32
    %192 = vector.broadcast %c5_i32 : i32 to vector<8x128xi32>
    %193 = arith.cmpi eq, %37, %192 : vector<8x128xi32>
    %194 = vector.shape_cast %176 : vector<8x1xf32> to vector<8x1xf32>
    %195 = vector.broadcast %194 : vector<8x1xf32> to vector<8x128xf32>
    %196 = arith.select %193, %195, %169 : vector<8x128xi1>, vector<8x128xf32>
    %c5_i32_56 = arith.constant 5 : i32
    %197 = vector.broadcast %c5_i32_56 : i32 to vector<8x128xi32>
    %198 = arith.cmpi eq, %37, %197 : vector<8x128xi32>
    %199 = vector.shape_cast %187 : vector<8x1xi32> to vector<8x1xi32>
    %200 = vector.broadcast %199 : vector<8x1xi32> to vector<8x128xi32>
    %201 = arith.select %198, %200, %174 : vector<8x128xi1>, vector<8x128xi32>
    %cst_57 = arith.constant dense<0xFF800000> : vector<8xf32>
    %202 = vector.multi_reduction <maximumf>, %191, %cst_57 [1] : vector<8x256xf32> to vector<8xf32>
    %203 = vector.shape_cast %202 : vector<8xf32> to vector<8x1xf32>
    %204 = vector.broadcast %203 : vector<8x1xf32> to vector<8x256xf32>
    %205 = arith.cmpf oeq, %191, %204 : vector<8x256xf32>
    %cst_58 = arith.constant 0x4C000000 : f32
    %206 = vector.broadcast %cst_58 : f32 to vector<8x256xf32>
    %207 = arith.select %205, %36, %206 : vector<8x256xi1>, vector<8x256xf32>
    %cst_59 = arith.constant dense<0x7F800000> : vector<8xf32>
    %208 = vector.multi_reduction <minimumf>, %207, %cst_59 [1] : vector<8x256xf32> to vector<8xf32>
    %209 = vector.shape_cast %208 : vector<8xf32> to vector<8x1xf32>
    %210 = arith.fptosi %209 : vector<8x1xf32> to vector<8x1xi32>
    %c6_i32_60 = arith.constant 6 : i32
    %211 = vector.broadcast %c6_i32_60 : i32 to vector<8x1xi32>
    %212 = arith.shrsi %210, %211 : vector<8x1xi32>
    %c63_i32_61 = arith.constant 63 : i32
    %213 = vector.broadcast %c63_i32_61 : i32 to vector<8x1xi32>
    %214 = arith.andi %210, %213 : vector<8x1xi32>
    %215 = vector.broadcast %212 : vector<8x1xi32> to vector<8x256xi32>
    %216 = arith.cmpi eq, %32, %215 : vector<8x256xi32>
    %cst_62 = arith.constant 0xFF800000 : f32
    %217 = vector.broadcast %cst_62 : f32 to vector<8x256xf32>
    %218 = arith.select %216, %217, %191 : vector<8x256xi1>, vector<8x256xf32>
    %c6_i32_63 = arith.constant 6 : i32
    %219 = vector.broadcast %c6_i32_63 : i32 to vector<8x128xi32>
    %220 = arith.cmpi eq, %37, %219 : vector<8x128xi32>
    %221 = vector.shape_cast %203 : vector<8x1xf32> to vector<8x1xf32>
    %222 = vector.broadcast %221 : vector<8x1xf32> to vector<8x128xf32>
    %223 = arith.select %220, %222, %196 : vector<8x128xi1>, vector<8x128xf32>
    %c6_i32_64 = arith.constant 6 : i32
    %224 = vector.broadcast %c6_i32_64 : i32 to vector<8x128xi32>
    %225 = arith.cmpi eq, %37, %224 : vector<8x128xi32>
    %226 = vector.shape_cast %214 : vector<8x1xi32> to vector<8x1xi32>
    %227 = vector.broadcast %226 : vector<8x1xi32> to vector<8x128xi32>
    %228 = arith.select %225, %227, %201 : vector<8x128xi1>, vector<8x128xi32>
    %cst_65 = arith.constant dense<0xFF800000> : vector<8xf32>
    %229 = vector.multi_reduction <maximumf>, %218, %cst_65 [1] : vector<8x256xf32> to vector<8xf32>
    %230 = vector.shape_cast %229 : vector<8xf32> to vector<8x1xf32>
    %231 = vector.broadcast %230 : vector<8x1xf32> to vector<8x256xf32>
    %232 = arith.cmpf oeq, %218, %231 : vector<8x256xf32>
    %cst_66 = arith.constant 0x4C000000 : f32
    %233 = vector.broadcast %cst_66 : f32 to vector<8x256xf32>
    %234 = arith.select %232, %36, %233 : vector<8x256xi1>, vector<8x256xf32>
    %cst_67 = arith.constant dense<0x7F800000> : vector<8xf32>
    %235 = vector.multi_reduction <minimumf>, %234, %cst_67 [1] : vector<8x256xf32> to vector<8xf32>
    %236 = vector.shape_cast %235 : vector<8xf32> to vector<8x1xf32>
    %237 = arith.fptosi %236 : vector<8x1xf32> to vector<8x1xi32>
    %c6_i32_68 = arith.constant 6 : i32
    %238 = vector.broadcast %c6_i32_68 : i32 to vector<8x1xi32>
    %239 = arith.shrsi %237, %238 : vector<8x1xi32>
    %c63_i32_69 = arith.constant 63 : i32
    %240 = vector.broadcast %c63_i32_69 : i32 to vector<8x1xi32>
    %241 = arith.andi %237, %240 : vector<8x1xi32>
    %242 = vector.broadcast %239 : vector<8x1xi32> to vector<8x256xi32>
    %243 = arith.cmpi eq, %32, %242 : vector<8x256xi32>
    %cst_70 = arith.constant 0xFF800000 : f32
    %244 = vector.broadcast %cst_70 : f32 to vector<8x256xf32>
    %245 = arith.select %243, %244, %218 : vector<8x256xi1>, vector<8x256xf32>
    %c7_i32 = arith.constant 7 : i32
    %246 = vector.broadcast %c7_i32 : i32 to vector<8x128xi32>
    %247 = arith.cmpi eq, %37, %246 : vector<8x128xi32>
    %248 = vector.shape_cast %230 : vector<8x1xf32> to vector<8x1xf32>
    %249 = vector.broadcast %248 : vector<8x1xf32> to vector<8x128xf32>
    %250 = arith.select %247, %249, %223 : vector<8x128xi1>, vector<8x128xf32>
    %c7_i32_71 = arith.constant 7 : i32
    %251 = vector.broadcast %c7_i32_71 : i32 to vector<8x128xi32>
    %252 = arith.cmpi eq, %37, %251 : vector<8x128xi32>
    %253 = vector.shape_cast %241 : vector<8x1xi32> to vector<8x1xi32>
    %254 = vector.broadcast %253 : vector<8x1xi32> to vector<8x128xi32>
    %255 = arith.select %252, %254, %228 : vector<8x128xi1>, vector<8x128xi32>
    %cst_72 = arith.constant dense<0xFF800000> : vector<8xf32>
    %256 = vector.multi_reduction <maximumf>, %245, %cst_72 [1] : vector<8x256xf32> to vector<8xf32>
    %257 = vector.shape_cast %256 : vector<8xf32> to vector<8x1xf32>
    %258 = vector.broadcast %257 : vector<8x1xf32> to vector<8x256xf32>
    %259 = arith.cmpf oeq, %245, %258 : vector<8x256xf32>
    %cst_73 = arith.constant 0x4C000000 : f32
    %260 = vector.broadcast %cst_73 : f32 to vector<8x256xf32>
    %261 = arith.select %259, %36, %260 : vector<8x256xi1>, vector<8x256xf32>
    %cst_74 = arith.constant dense<0x7F800000> : vector<8xf32>
    %262 = vector.multi_reduction <minimumf>, %261, %cst_74 [1] : vector<8x256xf32> to vector<8xf32>
    %263 = vector.shape_cast %262 : vector<8xf32> to vector<8x1xf32>
    %264 = arith.fptosi %263 : vector<8x1xf32> to vector<8x1xi32>
    %c6_i32_75 = arith.constant 6 : i32
    %265 = vector.broadcast %c6_i32_75 : i32 to vector<8x1xi32>
    %266 = arith.shrsi %264, %265 : vector<8x1xi32>
    %c63_i32_76 = arith.constant 63 : i32
    %267 = vector.broadcast %c63_i32_76 : i32 to vector<8x1xi32>
    %268 = arith.andi %264, %267 : vector<8x1xi32>
    %269 = vector.broadcast %266 : vector<8x1xi32> to vector<8x256xi32>
    %270 = arith.cmpi eq, %32, %269 : vector<8x256xi32>
    %cst_77 = arith.constant 0xFF800000 : f32
    %271 = vector.broadcast %cst_77 : f32 to vector<8x256xf32>
    %272 = arith.select %270, %271, %245 : vector<8x256xi1>, vector<8x256xf32>
    %c8_i32 = arith.constant 8 : i32
    %273 = vector.broadcast %c8_i32 : i32 to vector<8x128xi32>
    %274 = arith.cmpi eq, %37, %273 : vector<8x128xi32>
    %275 = vector.shape_cast %257 : vector<8x1xf32> to vector<8x1xf32>
    %276 = vector.broadcast %275 : vector<8x1xf32> to vector<8x128xf32>
    %277 = arith.select %274, %276, %250 : vector<8x128xi1>, vector<8x128xf32>
    %c8_i32_78 = arith.constant 8 : i32
    %278 = vector.broadcast %c8_i32_78 : i32 to vector<8x128xi32>
    %279 = arith.cmpi eq, %37, %278 : vector<8x128xi32>
    %280 = vector.shape_cast %268 : vector<8x1xi32> to vector<8x1xi32>
    %281 = vector.broadcast %280 : vector<8x1xi32> to vector<8x128xi32>
    %282 = arith.select %279, %281, %255 : vector<8x128xi1>, vector<8x128xi32>
    %cst_79 = arith.constant dense<0xFF800000> : vector<8xf32>
    %283 = vector.multi_reduction <maximumf>, %272, %cst_79 [1] : vector<8x256xf32> to vector<8xf32>
    %284 = vector.shape_cast %283 : vector<8xf32> to vector<8x1xf32>
    %285 = vector.broadcast %284 : vector<8x1xf32> to vector<8x256xf32>
    %286 = arith.cmpf oeq, %272, %285 : vector<8x256xf32>
    %cst_80 = arith.constant 0x4C000000 : f32
    %287 = vector.broadcast %cst_80 : f32 to vector<8x256xf32>
    %288 = arith.select %286, %36, %287 : vector<8x256xi1>, vector<8x256xf32>
    %cst_81 = arith.constant dense<0x7F800000> : vector<8xf32>
    %289 = vector.multi_reduction <minimumf>, %288, %cst_81 [1] : vector<8x256xf32> to vector<8xf32>
    %290 = vector.shape_cast %289 : vector<8xf32> to vector<8x1xf32>
    %291 = arith.fptosi %290 : vector<8x1xf32> to vector<8x1xi32>
    %c63_i32_82 = arith.constant 63 : i32
    %292 = vector.broadcast %c63_i32_82 : i32 to vector<8x1xi32>
    %293 = arith.andi %291, %292 : vector<8x1xi32>
    %c9_i32 = arith.constant 9 : i32
    %294 = vector.broadcast %c9_i32 : i32 to vector<8x128xi32>
    %295 = arith.cmpi eq, %37, %294 : vector<8x128xi32>
    %296 = vector.shape_cast %284 : vector<8x1xf32> to vector<8x1xf32>
    %297 = vector.broadcast %296 : vector<8x1xf32> to vector<8x128xf32>
    %298 = arith.select %295, %297, %277 : vector<8x128xi1>, vector<8x128xf32>
    %c9_i32_83 = arith.constant 9 : i32
    %299 = vector.broadcast %c9_i32_83 : i32 to vector<8x128xi32>
    %300 = arith.cmpi eq, %37, %299 : vector<8x128xi32>
    %301 = vector.shape_cast %293 : vector<8x1xi32> to vector<8x1xi32>
    %302 = vector.broadcast %301 : vector<8x1xi32> to vector<8x128xi32>
    %303 = arith.select %300, %302, %282 : vector<8x128xi1>, vector<8x128xi32>
    %c0_84 = arith.constant 0 : index
    %c0_85 = arith.constant 0 : index
    %304 = vector.load %arg6[%c0_84, %c0_85] : memref<8x128xf32, #tpu.memory_space<vmem>>, vector<8x128xf32>
    tpu.vector_store %arg6[%c0_84, %c0_85], %298 {strides = array<i32>} : memref<8x128xf32, #tpu.memory_space<vmem>>, vector<8x128xf32>,
    %c0_86 = arith.constant 0 : index
    %c0_87 = arith.constant 0 : index
    %305 = vector.load %arg7[%c0_86, %c0_87] : memref<8x128xi32, #tpu.memory_space<vmem>>, vector<8x128xi32>
    tpu.vector_store %arg7[%c0_86, %c0_87], %303 {strides = array<i32>} : memref<8x128xi32, #tpu.memory_space<vmem>>, vector<8x128xi32>,
    %c1_i32_88 = arith.constant 1 : i32
    %306 = arith.cmpi eq, %arg1, %c1_i32_88 : i32
    %307 = arith.extui %306 : i1 to i32
    %c0_i32_89 = arith.constant 0 : i32
    %308 = arith.cmpi ne, %307, %c0_i32_89 : i32
    scf.if %308 {
      %cst_90 = arith.constant 14.2857141 : f32
      %309 = vector.broadcast %cst_90 : f32 to vector<8x128xf32>
      %310 = arith.mulf %298, %309 : vector<8x128xf32>
      %cst_91 = arith.constant dense<0xFF800000> : vector<8xf32>
      %311 = vector.multi_reduction <maximumf>, %310, %cst_91 [1] : vector<8x128xf32> to vector<8xf32>
      %312 = vector.shape_cast %311 : vector<8xf32> to vector<8x1xf32>
      %313 = vector.broadcast %312 : vector<8x1xf32> to vector<8x128xf32>
      %314 = arith.subf %310, %313 : vector<8x128xf32>
      %315 = math.exp %314 : vector<8x128xf32>
      %cst_92 = arith.constant dense<0.000000e+00> : vector<8xf32>
      %316 = vector.multi_reduction <add>, %315, %cst_92 [1] : vector<8x128xf32> to vector<8xf32>
      %317 = vector.shape_cast %316 : vector<8xf32> to vector<8x1xf32>
      %318 = vector.broadcast %317 : vector<8x1xf32> to vector<8x128xf32>
      %319 = arith.divf %315, %318 : vector<8x128xf32>
      %320 = tpu.iota {dimensions = array<i32: 1>} : vector<8x128xi32>
      %cst_93 = arith.constant 0.000000e+00 : f32
      %321 = vector.broadcast %cst_93 : f32 to vector<8x128xf32>
      %322 = vector.extract_strided_slice %303 {offsets = [0, 0], sizes = [8, 1], strides = [1, 1]} : vector<8x128xi32> to vector<8x1xi32>
      %323 = vector.broadcast %322 : vector<8x1xi32> to vector<8x128xi32>
      %324 = arith.cmpi eq, %320, %323 : vector<8x128xi32>
      %325 = vector.extract_strided_slice %319 {offsets = [0, 0], sizes = [8, 1], strides = [1, 1]} : vector<8x128xf32> to vector<8x1xf32>
      %cst_94 = arith.constant 0.000000e+00 : f32
      %326 = vector.shape_cast %325 : vector<8x1xf32> to vector<8x1xf32>
      %327 = vector.broadcast %326 : vector<8x1xf32> to vector<8x128xf32>
      %328 = vector.broadcast %cst_94 : f32 to vector<8x128xf32>
      %329 = arith.select %324, %327, %328 : vector<8x128xi1>, vector<8x128xf32>
      %330 = arith.addf %321, %329 : vector<8x128xf32>
      %331 = vector.extract_strided_slice %303 {offsets = [0, 1], sizes = [8, 1], strides = [1, 1]} : vector<8x128xi32> to vector<8x1xi32>
      %332 = vector.broadcast %331 : vector<8x1xi32> to vector<8x128xi32>
      %333 = arith.cmpi eq, %320, %332 : vector<8x128xi32>
      %334 = vector.extract_strided_slice %319 {offsets = [0, 1], sizes = [8, 1], strides = [1, 1]} : vector<8x128xf32> to vector<8x1xf32>
      %cst_95 = arith.constant 0.000000e+00 : f32
      %335 = vector.shape_cast %334 : vector<8x1xf32> to vector<8x1xf32>
      %336 = vector.broadcast %335 : vector<8x1xf32> to vector<8x128xf32>
      %337 = vector.broadcast %cst_95 : f32 to vector<8x128xf32>
      %338 = arith.select %333, %336, %337 : vector<8x128xi1>, vector<8x128xf32>
      %339 = arith.addf %330, %338 : vector<8x128xf32>
      %340 = vector.extract_strided_slice %303 {offsets = [0, 2], sizes = [8, 1], strides = [1, 1]} : vector<8x128xi32> to vector<8x1xi32>
      %341 = vector.broadcast %340 : vector<8x1xi32> to vector<8x128xi32>
      %342 = arith.cmpi eq, %320, %341 : vector<8x128xi32>
      %343 = vector.extract_strided_slice %319 {offsets = [0, 2], sizes = [8, 1], strides = [1, 1]} : vector<8x128xf32> to vector<8x1xf32>
      %cst_96 = arith.constant 0.000000e+00 : f32
      %344 = vector.shape_cast %343 : vector<8x1xf32> to vector<8x1xf32>
      %345 = vector.broadcast %344 : vector<8x1xf32> to vector<8x128xf32>
      %346 = vector.broadcast %cst_96 : f32 to vector<8x128xf32>
      %347 = arith.select %342, %345, %346 : vector<8x128xi1>, vector<8x128xf32>
      %348 = arith.addf %339, %347 : vector<8x128xf32>
      %349 = vector.extract_strided_slice %303 {offsets = [0, 3], sizes = [8, 1], strides = [1, 1]} : vector<8x128xi32> to vector<8x1xi32>
      %350 = vector.broadcast %349 : vector<8x1xi32> to vector<8x128xi32>
      %351 = arith.cmpi eq, %320, %350 : vector<8x128xi32>
      %352 = vector.extract_strided_slice %319 {offsets = [0, 3], sizes = [8, 1], strides = [1, 1]} : vector<8x128xf32> to vector<8x1xf32>
      %cst_97 = arith.constant 0.000000e+00 : f32
      %353 = vector.shape_cast %352 : vector<8x1xf32> to vector<8x1xf32>
      %354 = vector.broadcast %353 : vector<8x1xf32> to vector<8x128xf32>
      %355 = vector.broadcast %cst_97 : f32 to vector<8x128xf32>
      %356 = arith.select %351, %354, %355 : vector<8x128xi1>, vector<8x128xf32>
      %357 = arith.addf %348, %356 : vector<8x128xf32>
      %358 = vector.extract_strided_slice %303 {offsets = [0, 4], sizes = [8, 1], strides = [1, 1]} : vector<8x128xi32> to vector<8x1xi32>
      %359 = vector.broadcast %358 : vector<8x1xi32> to vector<8x128xi32>
      %360 = arith.cmpi eq, %320, %359 : vector<8x128xi32>
      %361 = vector.extract_strided_slice %319 {offsets = [0, 4], sizes = [8, 1], strides = [1, 1]} : vector<8x128xf32> to vector<8x1xf32>
      %cst_98 = arith.constant 0.000000e+00 : f32
      %362 = vector.shape_cast %361 : vector<8x1xf32> to vector<8x1xf32>
      %363 = vector.broadcast %362 : vector<8x1xf32> to vector<8x128xf32>
      %364 = vector.broadcast %cst_98 : f32 to vector<8x128xf32>
      %365 = arith.select %360, %363, %364 : vector<8x128xi1>, vector<8x128xf32>
      %366 = arith.addf %357, %365 : vector<8x128xf32>
      %367 = vector.extract_strided_slice %303 {offsets = [0, 5], sizes = [8, 1], strides = [1, 1]} : vector<8x128xi32> to vector<8x1xi32>
      %368 = vector.broadcast %367 : vector<8x1xi32> to vector<8x128xi32>
      %369 = arith.cmpi eq, %320, %368 : vector<8x128xi32>
      %370 = vector.extract_strided_slice %319 {offsets = [0, 5], sizes = [8, 1], strides = [1, 1]} : vector<8x128xf32> to vector<8x1xf32>
      %cst_99 = arith.constant 0.000000e+00 : f32
      %371 = vector.shape_cast %370 : vector<8x1xf32> to vector<8x1xf32>
      %372 = vector.broadcast %371 : vector<8x1xf32> to vector<8x128xf32>
      %373 = vector.broadcast %cst_99 : f32 to vector<8x128xf32>
      %374 = arith.select %369, %372, %373 : vector<8x128xi1>, vector<8x128xf32>
      %375 = arith.addf %366, %374 : vector<8x128xf32>
      %376 = vector.extract_strided_slice %303 {offsets = [0, 6], sizes = [8, 1], strides = [1, 1]} : vector<8x128xi32> to vector<8x1xi32>
      %377 = vector.broadcast %376 : vector<8x1xi32> to vector<8x128xi32>
      %378 = arith.cmpi eq, %320, %377 : vector<8x128xi32>
      %379 = vector.extract_strided_slice %319 {offsets = [0, 6], sizes = [8, 1], strides = [1, 1]} : vector<8x128xf32> to vector<8x1xf32>
      %cst_100 = arith.constant 0.000000e+00 : f32
      %380 = vector.shape_cast %379 : vector<8x1xf32> to vector<8x1xf32>
      %381 = vector.broadcast %380 : vector<8x1xf32> to vector<8x128xf32>
      %382 = vector.broadcast %cst_100 : f32 to vector<8x128xf32>
      %383 = arith.select %378, %381, %382 : vector<8x128xi1>, vector<8x128xf32>
      %384 = arith.addf %375, %383 : vector<8x128xf32>
      %385 = vector.extract_strided_slice %303 {offsets = [0, 7], sizes = [8, 1], strides = [1, 1]} : vector<8x128xi32> to vector<8x1xi32>
      %386 = vector.broadcast %385 : vector<8x1xi32> to vector<8x128xi32>
      %387 = arith.cmpi eq, %320, %386 : vector<8x128xi32>
      %388 = vector.extract_strided_slice %319 {offsets = [0, 7], sizes = [8, 1], strides = [1, 1]} : vector<8x128xf32> to vector<8x1xf32>
      %cst_101 = arith.constant 0.000000e+00 : f32
      %389 = vector.shape_cast %388 : vector<8x1xf32> to vector<8x1xf32>
      %390 = vector.broadcast %389 : vector<8x1xf32> to vector<8x128xf32>
      %391 = vector.broadcast %cst_101 : f32 to vector<8x128xf32>
      %392 = arith.select %387, %390, %391 : vector<8x128xi1>, vector<8x128xf32>
      %393 = arith.addf %384, %392 : vector<8x128xf32>
      %394 = vector.extract_strided_slice %303 {offsets = [0, 8], sizes = [8, 1], strides = [1, 1]} : vector<8x128xi32> to vector<8x1xi32>
      %395 = vector.broadcast %394 : vector<8x1xi32> to vector<8x128xi32>
      %396 = arith.cmpi eq, %320, %395 : vector<8x128xi32>
      %397 = vector.extract_strided_slice %319 {offsets = [0, 8], sizes = [8, 1], strides = [1, 1]} : vector<8x128xf32> to vector<8x1xf32>
      %cst_102 = arith.constant 0.000000e+00 : f32
      %398 = vector.shape_cast %397 : vector<8x1xf32> to vector<8x1xf32>
      %399 = vector.broadcast %398 : vector<8x1xf32> to vector<8x128xf32>
      %400 = vector.broadcast %cst_102 : f32 to vector<8x128xf32>
      %401 = arith.select %396, %399, %400 : vector<8x128xi1>, vector<8x128xf32>
      %402 = arith.addf %393, %401 : vector<8x128xf32>
      %403 = vector.extract_strided_slice %303 {offsets = [0, 9], sizes = [8, 1], strides = [1, 1]} : vector<8x128xi32> to vector<8x1xi32>
      %404 = vector.broadcast %403 : vector<8x1xi32> to vector<8x128xi32>
      %405 = arith.cmpi eq, %320, %404 : vector<8x128xi32>
      %406 = vector.extract_strided_slice %319 {offsets = [0, 9], sizes = [8, 1], strides = [1, 1]} : vector<8x128xf32> to vector<8x1xf32>
      %cst_103 = arith.constant 0.000000e+00 : f32
      %407 = vector.shape_cast %406 : vector<8x1xf32> to vector<8x1xf32>
      %408 = vector.broadcast %407 : vector<8x1xf32> to vector<8x128xf32>
      %409 = vector.broadcast %cst_103 : f32 to vector<8x128xf32>
      %410 = arith.select %405, %408, %409 : vector<8x128xi1>, vector<8x128xf32>
      %411 = arith.addf %402, %410 : vector<8x128xf32>
      %c0_104 = arith.constant 0 : index
      %c0_105 = arith.constant 0 : index
      %412 = vector.load %arg5[%c0_104, %c0_105] : memref<8x128xf32, #tpu.memory_space<vmem>>, vector<8x128xf32>
      tpu.vector_store %arg5[%c0_104, %c0_105], %411 {strides = array<i32>} : memref<8x128xf32, #tpu.memory_space<vmem>>, vector<8x128xf32>,
    } else {
    }
    return
  }
  func.func @transform_0(%arg0: i32, %arg1: i32) -> (i32, i32) {
    %c0_i32 = arith.constant 0 : i32
    %c0_i32_0 = arith.constant 0 : i32
    return %arg0, %c0_i32 : i32, i32
  }
  func.func @transform_1(%arg0: i32, %arg1: i32) -> (i32, i32) {
    %c0_i32 = arith.constant 0 : i32
    %c0_i32_0 = arith.constant 0 : i32
    return %c0_i32, %arg1 : i32, i32
  }
  func.func @transform_2(%arg0: i32, %arg1: i32) -> (i32, i32) {
    %c0_i32 = arith.constant 0 : i32
    %c0_i32_0 = arith.constant 0 : i32
    return %c0_i32, %arg1 : i32, i32
  }
  func.func @transform_3(%arg0: i32, %arg1: i32) -> (i32, i32) {
    %c0_i32 = arith.constant 0 : i32
    %c0_i32_0 = arith.constant 0 : i32
    return %arg0, %c0_i32 : i32, i32
  }
}

</mosaic_0001>

<llo_original>
// kernel: tpu_custom_call.1
$region0: #{tpu_custom_call.1}
  #allocation0 [shape = 'u32[]', space=smem, size = 0x4, offset = 0x4, fixed_abs, tag = 'smem constant byte address 0x4 - core index']
  #allocation1 [shape = 'u32[144,128]{1,0:T(1,128)}', space=vmem, size = 0x12000, scoped, tag = 'internal scratch']
  #allocation2 [shape = 'f32[8,128]{1,0:T(8,128)}', space=vmem, size = 0x1000, scoped, tag = 'scratch operand']
  #allocation3 [shape = 's32[8,128]{1,0:T(8,128)}', space=vmem, size = 0x1000, scoped, tag = 'scratch operand']
  %s0 = inlined_call_operand.hbm [shape: f32[8,32], index: 0, kind: input, shape index: {}]
  %s1 = inlined_call_operand.hbm [shape: bf16[32,256], index: 1, kind: input, shape index: {}]
  %s2 = inlined_call_operand.vmem [shape: s32[1,256], index: 2, kind: input, shape index: {}]
  %s3 = inlined_call_operand.hbm [shape: f32[8,128], index: 3, kind: output, shape index: {}]
  %s4 = sld [smem:[#allocation0]]
  $region61: #{tpu_custom_call.1} parent=0
    _
  %s6 = ssub.s32 1, %s4
  %s7 = scalar_select 0, %s6, %s4
  $region1: #{tpu_custom_call.1} parent=0
    #allocation4 [shape = 'u8[4096]{0}', space=vmem, size = 0x1000, scoped, tag = 'input window, operand 0, single buffered']
    #allocation5 [shape = 's32[2]{0}', space=sflag, size = 0x8, scoped, tag = 'scoped memory for tpu_custom_call.1']
    #allocation6 [shape = 's32[2]{0}', space=sflag, size = 0x8, scoped, tag = 'scoped memory for tpu_custom_call.1']
    #allocation7 [shape = 'u8[16384]{0}', space=vmem, size = 0x4000, scoped, tag = 'input window, operand 1']
    #allocation8 [shape = 's32[2]{0}', space=sflag, size = 0x8, scoped, tag = 'scoped memory for tpu_custom_call.1']
    #allocation9 [shape = 'u8[4096]{0}', space=vmem, size = 0x1000, scoped, tag = 'output window, operand 0, single buffered']
    %8 = vsyncpa [#allocation5], 0
    %9 = vsyncpa [#allocation8], 0
    %s10 = scalar_lea.sflag [#allocation8], 1
    %11 = vsyncpa %s10, 0
    %12 = vsyncpa [#allocation6], 0
    loop: start=0, step=1, limit=4
    $region2: #{tpu_custom_call.1} parent=1 // loop_pre_header
      _
    $region3: #{tpu_custom_call.1} parent=1 // loop_header
      %s14 = sphi 0, %s18
      %p15 = scmp.ge.s32.totalorder %s14, 4
      %s21 = sphi 0, %s33
      %s22 = sphi 0, %s29
      %s23 = sphi 0, %s21
      %s24 = sphi 0, %s22
      %s25 = sphi 0, %s23
      %s26 = sphi 0, %s24
      %s36 = sphi 0, %s38
      %s39 = sphi 0, %s36
      %s40 = sphi 0, %s39
      %s56 = sphi 0, %s40
      %s62 = sphi 0, %s64
      %s65 = sphi 0, %s62
      %s66 = sphi 0, %s65
      %s82 = sphi 0, %s66
      %s88 = sphi 0, %s90
      %s91 = sphi 0, %s88
      %s92 = sphi 0, %s91
      %s108 = sphi 0, %s92
      %s114 = sphi 0, %s116
      %s117 = sphi 0, %s114
      %s118 = sphi 0, %s117
      %s134 = sphi 0, %s118
    $region4: #{tpu_custom_call.1} parent=1 // loop_header_branch
      %17 = sbr.rel (%p15) target = $region8
    $region5: #{tpu_custom_call.1} parent=1 // loop_body
      %s19 = ssub.s32 %s14, 1
      %s20 = ssub.s32 %s14, 2
      %s27 = sadd.s32 1, %s22
      %p28 = scmp.ge.s32.totalorder %s27, 2
      %s29 = scalar_select %p28, 0, %s27
      %s30 = sadd.s32 1, %s21
      %s31 = scalar_select %p28, %s30, %s21
      %p32 = scmp.ge.s32.totalorder %s31, 1
      %s33 = scalar_select %p32, 0, %s31
      %s34 = ssub.s32 %s21, %s33
      %p35 = scmp.eq.s32.totalorder %s34, 0
      %s37 = sadd.s32 %s36, 1
      %s38 = scalar_select %p35, %s36, %s37
      %p41 = pneg %p35
      %p42 = scmp.eq.s32.totalorder %s14, 1
      %p43 = por %p41, %p42
      %p44 = scmp.ne.s32.totalorder %s36, %s39
      %p45 = scmp.eq.s32.totalorder %s14, 0
      %p46 = por %p44, %p45
      %p47 = scmp.ne.s32.totalorder %s36, %s39
      %p48 = scmp.eq.s32.totalorder %s19, 1
      %p49 = por %p47, %p48
      %p50 = scmp.ne.s32.totalorder %s39, %s40
      %p51 = scmp.eq.s32.totalorder %s19, 0
      %p52 = por %p50, %p51
      %p53 = scmp.ne.s32.totalorder %s39, %s40
      %p54 = scmp.eq.s32.totalorder %s20, 1
      %p55 = por %p53, %p54
      %p57 = scmp.ne.s32.totalorder %s40, %s56
      %p58 = scmp.eq.s32.totalorder %s20, 0
      %p59 = por %p57, %p58
      %s60 = ssub.s32 %s22, %s29
      %p61 = scmp.eq.s32.totalorder %s60, 0
      %s63 = sadd.s32 %s62, 1
      %s64 = scalar_select %p61, %s62, %s63
      %p67 = pneg %p61
      %p68 = scmp.eq.s32.totalorder %s14, 1
      %p69 = por %p67, %p68
      %p70 = scmp.ne.s32.totalorder %s62, %s65
      %p71 = scmp.eq.s32.totalorder %s14, 0
      %p72 = por %p70, %p71
      %p73 = scmp.ne.s32.totalorder %s62, %s65
      %p74 = scmp.eq.s32.totalorder %s19, 1
      %p75 = por %p73, %p74
      %p76 = scmp.ne.s32.totalorder %s65, %s66
      %p77 = scmp.eq.s32.totalorder %s19, 0
      %p78 = por %p76, %p77
      %p79 = scmp.ne.s32.totalorder %s65, %s66
      %p80 = scmp.eq.s32.totalorder %s20, 1
      %p81 = por %p79, %p80
      %p83 = scmp.ne.s32.totalorder %s66, %s82
      %p84 = scmp.eq.s32.totalorder %s20, 0
      %p85 = por %p83, %p84
      %s86 = ssub.s32 %s22, %s29
      %p87 = scmp.eq.s32.totalorder %s86, 0
      %s89 = sadd.s32 %s88, 1
      %s90 = scalar_select %p87, %s88, %s89
      %p93 = pneg %p87
      %p94 = scmp.eq.s32.totalorder %s14, 1
      %p95 = por %p93, %p94
      %p96 = scmp.ne.s32.totalorder %s88, %s91
      %p97 = scmp.eq.s32.totalorder %s14, 0
      %p98 = por %p96, %p97
      %p99 = scmp.ne.s32.totalorder %s88, %s91
      %p100 = scmp.eq.s32.totalorder %s19, 1
      %p101 = por %p99, %p100
      %p102 = scmp.ne.s32.totalorder %s91, %s92
      %p103 = scmp.eq.s32.totalorder %s19, 0
      %p104 = por %p102, %p103
      %p105 = scmp.ne.s32.totalorder %s91, %s92
      %p106 = scmp.eq.s32.totalorder %s20, 1
      %p107 = por %p105, %p106
      %p109 = scmp.ne.s32.totalorder %s92, %s108
      %p110 = scmp.eq.s32.totalorder %s20, 0
      %p111 = por %p109, %p110
      %s112 = ssub.s32 %s21, %s33
      %p113 = scmp.eq.s32.totalorder %s112, 0
      %s115 = sadd.s32 %s114, 1
      %s116 = scalar_select %p113, %s114, %s115
      %p119 = pneg %p113
      %p120 = scmp.eq.s32.totalorder %s14, 1
      %p121 = por %p119, %p120
      %p122 = scmp.ne.s32.totalorder %s114, %s117
      %p123 = scmp.eq.s32.totalorder %s14, 0
      %p124 = por %p122, %p123
      %p125 = scmp.ne.s32.totalorder %s114, %s117
      %p126 = scmp.eq.s32.totalorder %s19, 1
      %p127 = por %p125, %p126
      %p128 = scmp.ne.s32.totalorder %s117, %s118
      %p129 = scmp.eq.s32.totalorder %s19, 0
      %p130 = por %p128, %p129
      %p131 = scmp.ne.s32.totalorder %s117, %s118
      %p132 = scmp.eq.s32.totalorder %s20, 1
      %p133 = por %p131, %p132
      %p135 = scmp.ne.s32.totalorder %s118, %s134
      %p136 = scmp.eq.s32.totalorder %s20, 0
      %p137 = por %p135, %p136
      %p138 = scmp.le.s32.totalorder 1, %s14
      %p139 = scmp.lt.s32.totalorder %s14, 3
      %p140 = pnand %p138, %p139
      %p141 = pneg %p140
      // Predicated region
      $region9: #{tpu_custom_call.1} parent=5 // pred_check
        _
      $region10: #{tpu_custom_call.1} parent=5 // pred_check_branch
        %143 = sbr.rel (%p140) target = $region12
      $region11: #{tpu_custom_call.1} parent=5 // pred_region
        %s144 = ssub.s32 %s14, 1
        // Predicated region
        $region13: #{tpu_custom_call.1} parent=11 // pred_check
          %p145 = pneg %p52
        $region14: #{tpu_custom_call.1} parent=11 // pred_check_branch
          %147 = sbr.rel (%p145) target = $region16
        $region15: #{tpu_custom_call.1} parent=11 // pred_region
          %s149 = ssub.s32 128, 128
          %150 = vsyncadd [#allocation5], %s149
          %s151 = smul.addr %s23, 128
          %s152 = scalar_lea.hbm %s0, %s151
          %s154 = sshll.u32 [#allocation4], 4
          %s155 = int_to_ptr.vmem [resolvable:$true] %s154
          %157 = dma.hbm_to_vmem [thread:$0]  %s152, 128, %s155, [#allocation5]
        $region16: #{tpu_custom_call.1} parent=11 // pred_fallthru
          _
      $region12: #{tpu_custom_call.1} parent=5 // pred_fallthru
        _
      %p158 = scmp.lt.s32.totalorder %s14, 2
      // Predicated region
      $region17: #{tpu_custom_call.1} parent=5 // pred_check
        %p159 = pneg %p158
      $region18: #{tpu_custom_call.1} parent=5 // pred_check_branch
        %161 = sbr.rel (%p159) target = $region20
      $region19: #{tpu_custom_call.1} parent=5 // pred_region
        // Predicated region
        $region21: #{tpu_custom_call.1} parent=19 // pred_check
          %p162 = pneg %p72
        $region22: #{tpu_custom_call.1} parent=19 // pred_check_branch
          %164 = sbr.rel (%p162) target = $region24
        $region23: #{tpu_custom_call.1} parent=19 // pred_region
          %s165 = sand.u32 %s62, 1
          %s166 = scalar_lea.sflag [#allocation8], %s165
          %s167 = sand.u32 %s62, 1
          %s168 = smul.addr %s167, 16
          %s169 = scalar_lea.vmem [#allocation7], %s168
          %s171 = ssub.s32 256, 256
          %172 = vsyncadd %s166, %s171
          %s173 = smul.addr %s22, 64
          %s174 = scalar_lea.hbm %s1, %s173
          %s175 = sshll.u32 %s169, 4
          %s176 = int_to_ptr.vmem [resolvable:$true] %s175
          %181 = dma.hbm_to_vmem [thread:$0]  %s174, 256, %s176, %s166, 128, 64, 4
        $region24: #{tpu_custom_call.1} parent=19 // pred_fallthru
          _
        // Predicated region
        $region25: #{tpu_custom_call.1} parent=19 // pred_check
          %p182 = pneg %p98
        $region26: #{tpu_custom_call.1} parent=19 // pred_check_branch
          %184 = sbr.rel (%p182) target = $region28
        $region27: #{tpu_custom_call.1} parent=19 // pred_region
          %p185 = scmp.lt.s32.totalorder %s22, 1
          %s186 = scalar_select %p185, %s22, 1
          %s187 = scalar_lea.vmem %s2, %s186
        $region28: #{tpu_custom_call.1} parent=19 // pred_fallthru
          _
      $region20: #{tpu_custom_call.1} parent=5 // pred_fallthru
        _
      %p188 = scmp.le.s32.totalorder 1, %s14
      %p189 = scmp.lt.s32.totalorder %s14, 3
      %p190 = pnand %p188, %p189
      %p191 = pneg %p190
      // Predicated region
      $region29: #{tpu_custom_call.1} parent=5 // pred_check
        _
      $region30: #{tpu_custom_call.1} parent=5 // pred_check_branch
        %193 = sbr.rel (%p190) target = $region32
      $region31: #{tpu_custom_call.1} parent=5 // pred_region
        %s194 = ssub.s32 %s14, 1
        // Predicated region
        $region33: #{tpu_custom_call.1} parent=31 // pred_check
          %p195 = pneg %p52
        $region34: #{tpu_custom_call.1} parent=31 // pred_check_branch
          %197 = sbr.rel (%p195) target = $region36
        $region35: #{tpu_custom_call.1} parent=31 // pred_region
          %198 = dma.done [#allocation5], 128
        $region36: #{tpu_custom_call.1} parent=31 // pred_fallthru
          _
        %s199 = sand.u32 %s65, 1
        %s200 = scalar_lea.sflag [#allocation8], %s199
        %s201 = sand.u32 %s65, 1
        %s202 = smul.addr %s201, 16
        %s203 = scalar_lea.vmem [#allocation7], %s202
        // Predicated region
        $region37: #{tpu_custom_call.1} parent=31 // pred_check
          %p204 = pneg %p78
        $region38: #{tpu_custom_call.1} parent=31 // pred_check_branch
          %206 = sbr.rel (%p204) target = $region40
        $region39: #{tpu_custom_call.1} parent=31 // pred_region
          %207 = dma.done %s200, 256
        $region40: #{tpu_custom_call.1} parent=31 // pred_fallthru
          _
        %p208 = pneg %p52
        %p209 = pneg %p49
        %s210 = sand.u32 %s65, 1
        %s211 = scalar_lea.sflag [#allocation8], %s210
        %s212 = sand.u32 %s65, 1
        %s213 = smul.addr %s212, 16
        %s214 = scalar_lea.vmem [#allocation7], %s213
        %p215 = pneg %p78
        %p216 = pneg %p75
        %p217 = scmp.lt.s32.totalorder %s24, 1
        %s218 = scalar_select %p217, %s24, 1
        %s219 = scalar_lea.vmem %s2, %s218
        %p220 = pneg %p104
        %p221 = pneg %p101
        %p222 = pneg %p130
        %p223 = pneg %p127
        %p224 = scmp.lt.s32.totalorder %s24, 1
        %s225 = scalar_select %p224, %s24, 1
        %s226 = scalar_lea.vmem %s2, %s225
        %p228 = scmp.eq.s32.totalorder %s24, 0
        // Predicated region
        $region41: #{tpu_custom_call.1} parent=31 // pred_check
          %p229 = pneg %p228
        $region42: #{tpu_custom_call.1} parent=31 // pred_check_branch
          %231 = sbr.rel (%p229) target = $region44
        $region43: #{tpu_custom_call.1} parent=31 // pred_region
          %232 = vst [vmem:[#allocation2] sm:$0xff] -inf
          %233 = vst [vmem:[#allocation3] sm:$0xff] 0
        $region44: #{tpu_custom_call.1} parent=31 // pred_fallthru
          _
        %v234 = vld [vmem:[#allocation4] sm:$0xff]
        %v235 = vmul.f32 %v234, %v234
        %vm236 = vcmask 261120
        %v237 = vsel %vm236, %v235, 0.0
        %238 = vadd.xlane.f32.xlu0 %v237
        %v239 = vpop.xlane.xlu0 %238
        %v240 = vrsqrt.pop %v239
        %v241 = vmul.f32 %v239, %v240
        %vm242 = vcmp.eq.f32.partialorder %v239, inf
        %v243 = vsel %vm242, %v239, %v241
        %vm244 = vcmp.eq.f32.partialorder %v239, 0.0
        %v245 = vand.u32 %v239, 2147483648
        %v246 = vsel %vm244, %v245, %v243
        %v247 = vmax.f32 %v246, 1e-12
        %v248 = vrcp.pop %v247
        %v249 = vmul.f32 %v234, %v248
        %v250 = vpack.c.bf16 %v249, %v249
        %v251 = vld [vmem:[%s203] sm:$0xf]
        %v252 = vld [vmem:[%s203 + $0x4] sm:$0xf]
        %v253 = vld [vmem:[%s203 + $0x8] sm:$0xf]
        %v254 = vld [vmem:[%s203 + $0xc] sm:$0xf]
        %v259 = vunpack.c.l.b16 %v251
        %v260 = vunpack.c.l.b16 %v252
        %v261 = vunpack.c.l.b16 %v253
        %v262 = vunpack.c.l.b16 %v254
        %v263 = vpack.c.b16 %v260, %v259
        %v264 = vpack.c.b16 %v262, %v261
        %v268 = vsel %vm236, %v250, 0
        %270 = vmatprep.subr.bf16.mxu0 0
        %271 = vmatpush1.bf16.msra.mxu0 %v263
        %272 = vmatprep.subr.bf16.mxu0 0
        %273 = vmatpush1.bf16.msra.mxu0 %v264
        %274 = vmatprep.subr.bf16.mxu0 0
        %275 = vmatpush1.bf16.msra.mxu0 0
        %276 = vmatprep.subr.bf16.mxu0 0
        %277 = vmatpush1.bf16.msra.mxu0 0
        %278 = vmatprep.subr.bf16.mxu0 0
        %279 = vmatpush1.bf16.msra.mxu0 0
        %280 = vmatprep.subr.bf16.mxu0 0
        %281 = vmatpush1.bf16.msra.mxu0 0
        %282 = vmatprep.subr.bf16.mxu0 0
        %283 = vmatpush1.bf16.msra.mxu0 0
        %284 = vmatprep.subr.bf16.mxu0 0
        %285 = vmatpush1.bf16.msra.mxu0 0
        %286 = vmatprep.subr.bf16.mxu0 0
        %287 = vmatpush1.bf16.msra.mxu0 0
        %288 = vmatprep.subr.bf16.mxu0 0
        %289 = vmatpush1.bf16.msra.mxu0 0
        %290 = vmatprep.subr.bf16.mxu0 0
        %291 = vmatpush1.bf16.msra.mxu0 0
        %292 = vmatprep.subr.bf16.mxu0 0
        %293 = vmatpush1.bf16.msra.mxu0 0
        %294 = vmatprep.subr.bf16.mxu0 0
        %295 = vmatpush1.bf16.msra.mxu0 0
        %296 = vmatprep.subr.bf16.mxu0 0
        %297 = vmatpush1.bf16.msra.mxu0 0
        %298 = vmatprep.subr.bf16.mxu0 0
        %299 = vmatpush1.bf16.msra.mxu0 0
        %300 = vmatprep.subr.bf16.mxu0 0
        %301 = vmatpush1.bf16.msra.mxu0 0
        %302 = vmatprep.mubr.bf16.mxu0 0
        %303 = vmatmul.mubr.bf16.gmra.mrb[0].mxu0 %v268
        %v304 = vpop.f32.mrb[0].mxu0
        %v305 = vadd.f32 0.0, %v304
        %v306 = vpop.f32.mrb[0].mxu0
        %v307 = vpop.f32.mrb[0].mxu0
        %v308 = vpop.f32.mrb[0].mxu0
        %309 = vdwg.mxu0
        %s310 = smul.u32 %s24, 128
        %v311 = vlaneseq
        %v312 = vand.u32 %v311, 127
        %v313 = vstv %s310
        %v314 = vadd.s32 %v313, %v312
        %vm315 = vcmp.lt.s32.totalorder %v314, 200
        %v316 = vsel %vm315, %v305, -inf
        %v317 = vld [vmem:[%s226] sm:$0x1]
        %v318 = vcvt.s32.f32 %v317
        %v320 = vlaneseq
        %v321 = vshrl.u32 %v320, 7
        %v322 = vsub.s32 0, %v321
        %v323 = vrot.slane %v318, %v322
        %v325 = vld [vmem:[#allocation2] sm:$0xff]
        %v326 = vld [vmem:[#allocation3] sm:$0xff]
        %v327 = vcvt.s32.f32 %v326
        %v328 = vadd.s32 %v312, 128
        %v329 = vcvt.s32.f32 %v312
        %v330 = vcvt.s32.f32 %v328
        %v331 = vmul.f32 %v329, 64.0
        %v332 = vmul.f32 %v330, 64.0
        %v333 = vadd.f32 %v331, %v327
        %v334 = vadd.f32 %v332, %v323
        %v335 = vmax.f32 %v325, %v316
        %336 = vmax.xlane.f32.xlu0 %v335
        %v337 = vpop.xlane.xlu0 %336
        %vm338 = vcmp.eq.f32.partialorder %v325, %v337
        %vm339 = vcmp.eq.f32.partialorder %v316, %v337
        %v340 = vsel %vm338, %v333, 33554432.0
        %v341 = vsel %vm339, %v334, 33554432.0
        %v342 = vmin.f32 %v340, %v341
        %343 = vmin.xlane.f32.xlu0 %v342
        %v344 = vpop.xlane.xlu0 %343
        %v345 = vcvt.f32.s32.to.zero.pseudo %v344
        %v346 = vshra.s32 %v345, 6
        %v347 = vand.u32 %v345, 63
        %vm348 = vcmp.eq.s32.totalorder %v312, %v346
        %vm349 = vcmp.eq.s32.totalorder %v328, %v346
        %v350 = vsel %vm348, -inf, %v325
        %v351 = vsel %vm349, -inf, %v316
        %vm352 = vcmp.eq.s32.totalorder %v312, 0
        %v353 = vsel %vm352, %v337, -inf
        %v354 = vsel %vm352, %v347, 0
        %v355 = vmax.f32 %v350, %v351
        %356 = vmax.xlane.f32.xlu0 %v355
        %v357 = vpop.xlane.xlu0 %356
        %vm358 = vcmp.eq.f32.partialorder %v350, %v357
        %vm359 = vcmp.eq.f32.partialorder %v351, %v357
        %v360 = vsel %vm358, %v333, 33554432.0
        %v361 = vsel %vm359, %v334, 33554432.0
        %v362 = vmin.f32 %v360, %v361
        %363 = vmin.xlane.f32.xlu0 %v362
        %v364 = vpop.xlane.xlu0 %363
        %v365 = vcvt.f32.s32.to.zero.pseudo %v364
        %v366 = vshra.s32 %v365, 6
        %v367 = vand.u32 %v365, 63
        %vm368 = vcmp.eq.s32.totalorder %v312, %v366
        %vm369 = vcmp.eq.s32.totalorder %v328, %v366
        %v370 = vsel %vm368, -inf, %v350
        %v371 = vsel %vm369, -inf, %v351
        %vm372 = vcmp.eq.s32.totalorder %v312, 1
        %v373 = vsel %vm372, %v357, %v353
        %v374 = vsel %vm372, %v367, %v354
        %v375 = vmax.f32 %v370, %v371
        %376 = vmax.xlane.f32.xlu0 %v375
        %v377 = vpop.xlane.xlu0 %376
        %vm378 = vcmp.eq.f32.partialorder %v370, %v377
        %vm379 = vcmp.eq.f32.partialorder %v371, %v377
        %v380 = vsel %vm378, %v333, 33554432.0
        %v381 = vsel %vm379, %v334, 33554432.0
        %v382 = vmin.f32 %v380, %v381
        %383 = vmin.xlane.f32.xlu0 %v382
        %v384 = vpop.xlane.xlu0 %383
        %v385 = vcvt.f32.s32.to.zero.pseudo %v384
        %v386 = vshra.s32 %v385, 6
        %v387 = vand.u32 %v385, 63
        %vm388 = vcmp.eq.s32.totalorder %v312, %v386
        %vm389 = vcmp.eq.s32.totalorder %v328, %v386
        %v390 = vsel %vm388, -inf, %v370
        %v391 = vsel %vm389, -inf, %v371
        %vm392 = vcmp.eq.s32.totalorder %v312, 2
        %v393 = vsel %vm392, %v377, %v373
        %v394 = vsel %vm392, %v387, %v374
        %v395 = vmax.f32 %v390, %v391
        %396 = vmax.xlane.f32.xlu0 %v395
        %v397 = vpop.xlane.xlu0 %396
        %vm398 = vcmp.eq.f32.partialorder %v390, %v397
        %vm399 = vcmp.eq.f32.partialorder %v391, %v397
        %v400 = vsel %vm398, %v333, 33554432.0
        %v401 = vsel %vm399, %v334, 33554432.0
        %v402 = vmin.f32 %v400, %v401
        %403 = vmin.xlane.f32.xlu0 %v402
        %v404 = vpop.xlane.xlu0 %403
        %v405 = vcvt.f32.s32.to.zero.pseudo %v404
        %v406 = vshra.s32 %v405, 6
        %v407 = vand.u32 %v405, 63
        %vm408 = vcmp.eq.s32.totalorder %v312, %v406
        %vm409 = vcmp.eq.s32.totalorder %v328, %v406
        %v410 = vsel %vm408, -inf, %v390
        %v411 = vsel %vm409, -inf, %v391
        %vm412 = vcmp.eq.s32.totalorder %v312, 3
        %v413 = vsel %vm412, %v397, %v393
        %v414 = vsel %vm412, %v407, %v394
        %v415 = vmax.f32 %v410, %v411
        %416 = vmax.xlane.f32.xlu0 %v415
        %v417 = vpop.xlane.xlu0 %416
        %vm418 = vcmp.eq.f32.partialorder %v410, %v417
        %vm419 = vcmp.eq.f32.partialorder %v411, %v417
        %v420 = vsel %vm418, %v333, 33554432.0
        %v421 = vsel %vm419, %v334, 33554432.0
        %v422 = vmin.f32 %v420, %v421
        %423 = vmin.xlane.f32.xlu0 %v422
        %v424 = vpop.xlane.xlu0 %423
        %v425 = vcvt.f32.s32.to.zero.pseudo %v424
        %v426 = vshra.s32 %v425, 6
        %v427 = vand.u32 %v425, 63
        %vm428 = vcmp.eq.s32.totalorder %v312, %v426
        %vm429 = vcmp.eq.s32.totalorder %v328, %v426
        %v430 = vsel %vm428, -inf, %v410
        %v431 = vsel %vm429, -inf, %v411
        %vm432 = vcmp.eq.s32.totalorder %v312, 4
        %v433 = vsel %vm432, %v417, %v413
        %v434 = vsel %vm432, %v427, %v414
        %v435 = vmax.f32 %v430, %v431
        %436 = vmax.xlane.f32.xlu0 %v435
        %v437 = vpop.xlane.xlu0 %436
        %vm438 = vcmp.eq.f32.partialorder %v430, %v437
        %vm439 = vcmp.eq.f32.partialorder %v431, %v437
        %v440 = vsel %vm438, %v333, 33554432.0
        %v441 = vsel %vm439, %v334, 33554432.0
        %v442 = vmin.f32 %v440, %v441
        %443 = vmin.xlane.f32.xlu0 %v442
        %v444 = vpop.xlane.xlu0 %443
        %v445 = vcvt.f32.s32.to.zero.pseudo %v444
        %v446 = vshra.s32 %v445, 6
        %v447 = vand.u32 %v445, 63
        %vm448 = vcmp.eq.s32.totalorder %v312, %v446
        %vm449 = vcmp.eq.s32.totalorder %v328, %v446
        %v450 = vsel %vm448, -inf, %v430
        %v451 = vsel %vm449, -inf, %v431
        %vm452 = vcmp.eq.s32.totalorder %v312, 5
        %v453 = vsel %vm452, %v437, %v433
        %v454 = vsel %vm452, %v447, %v434
        %v455 = vmax.f32 %v450, %v451
        %456 = vmax.xlane.f32.xlu0 %v455
        %v457 = vpop.xlane.xlu0 %456
        %vm458 = vcmp.eq.f32.partialorder %v450, %v457
        %vm459 = vcmp.eq.f32.partialorder %v451, %v457
        %v460 = vsel %vm458, %v333, 33554432.0
        %v461 = vsel %vm459, %v334, 33554432.0
        %v462 = vmin.f32 %v460, %v461
        %463 = vmin.xlane.f32.xlu0 %v462
        %v464 = vpop.xlane.xlu0 %463
        %v465 = vcvt.f32.s32.to.zero.pseudo %v464
        %v466 = vshra.s32 %v465, 6
        %v467 = vand.u32 %v465, 63
        %vm468 = vcmp.eq.s32.totalorder %v312, %v466
        %vm469 = vcmp.eq.s32.totalorder %v328, %v466
        %v470 = vsel %vm468, -inf, %v450
        %v471 = vsel %vm469, -inf, %v451
        %vm472 = vcmp.eq.s32.totalorder %v312, 6
        %v473 = vsel %vm472, %v457, %v453
        %v474 = vsel %vm472, %v467, %v454
        %v475 = vmax.f32 %v470, %v471
        %476 = vmax.xlane.f32.xlu0 %v475
        %v477 = vpop.xlane.xlu0 %476
        %vm478 = vcmp.eq.f32.partialorder %v470, %v477
        %vm479 = vcmp.eq.f32.partialorder %v471, %v477
        %v480 = vsel %vm478, %v333, 33554432.0
        %v481 = vsel %vm479, %v334, 33554432.0
        %v482 = vmin.f32 %v480, %v481
        %483 = vmin.xlane.f32.xlu0 %v482
        %v484 = vpop.xlane.xlu0 %483
        %v485 = vcvt.f32.s32.to.zero.pseudo %v484
        %v486 = vshra.s32 %v485, 6
        %v487 = vand.u32 %v485, 63
        %vm488 = vcmp.eq.s32.totalorder %v312, %v486
        %vm489 = vcmp.eq.s32.totalorder %v328, %v486
        %v490 = vsel %vm488, -inf, %v470
        %v491 = vsel %vm489, -inf, %v471
        %vm492 = vcmp.eq.s32.totalorder %v312, 7
        %v493 = vsel %vm492, %v477, %v473
        %v494 = vsel %vm492, %v487, %v474
        %v495 = vmax.f32 %v490, %v491
        %496 = vmax.xlane.f32.xlu0 %v495
        %v497 = vpop.xlane.xlu0 %496
        %vm498 = vcmp.eq.f32.partialorder %v490, %v497
        %vm499 = vcmp.eq.f32.partialorder %v491, %v497
        %v500 = vsel %vm498, %v333, 33554432.0
        %v501 = vsel %vm499, %v334, 33554432.0
        %v502 = vmin.f32 %v500, %v501
        %503 = vmin.xlane.f32.xlu0 %v502
        %v504 = vpop.xlane.xlu0 %503
        %v505 = vcvt.f32.s32.to.zero.pseudo %v504
        %v506 = vshra.s32 %v505, 6
        %v507 = vand.u32 %v505, 63
        %vm508 = vcmp.eq.s32.totalorder %v312, %v506
        %vm509 = vcmp.eq.s32.totalorder %v328, %v506
        %v510 = vsel %vm508, -inf, %v490
        %v511 = vsel %vm509, -inf, %v491
        %vm512 = vcmp.eq.s32.totalorder %v312, 8
        %v513 = vsel %vm512, %v497, %v493
        %v514 = vsel %vm512, %v507, %v494
        %v515 = vmax.f32 %v510, %v511
        %516 = vmax.xlane.f32.xlu0 %v515
        %v517 = vpop.xlane.xlu0 %516
        %vm518 = vcmp.eq.f32.partialorder %v510, %v517
        %vm519 = vcmp.eq.f32.partialorder %v511, %v517
        %v520 = vsel %vm518, %v333, 33554432.0
        %v521 = vsel %vm519, %v334, 33554432.0
        %v522 = vmin.f32 %v520, %v521
        %523 = vmin.xlane.f32.xlu0 %v522
        %v524 = vpop.xlane.xlu0 %523
        %v525 = vcvt.f32.s32.to.zero.pseudo %v524
        %v526 = vand.u32 %v525, 63
        %vm527 = vcmp.eq.s32.totalorder %v312, 9
        %v528 = vsel %vm527, %v517, %v513
        %v529 = vsel %vm527, %v526, %v514
        %530 = vst [vmem:[#allocation2] sm:$0xff] %v528
        %531 = vst [vmem:[#allocation3] sm:$0xff] %v529
        %p532 = scmp.eq.s32.totalorder %s24, 1
        // Predicated region
        $region45: #{tpu_custom_call.1} parent=31 // pred_check
          %p533 = pneg %p532
        $region46: #{tpu_custom_call.1} parent=31 // pred_check_branch
          %535 = sbr.rel (%p533) target = $region48
        $region47: #{tpu_custom_call.1} parent=31 // pred_region
          %v536 = vmul.f32 %v528, 14.285714
          %537 = vmax.xlane.f32.xlu0 %v536
          %v538 = vpop.xlane.xlu0 %537
          %v539 = vsub.f32 %v536, %v538
          %v540 = vmul.f32 %v539, 1.442695
          %v541 = vpow.pop %v540
          %542 = vadd.xlane.f32.xlu0 %v541
          %v543 = vpop.xlane.xlu0 %542
          %v544 = vrcp.pop %v543
          %v545 = vmul.f32 %v541, %v544
          %546 = vset.pattern.permute.xlu0 0
          %547 = vperm.xlu0 %546, %v529
          %v548 = vpop.permute.xlu0 %547
          %vm549 = vcmp.eq.s32.totalorder %v312, %v548
          %551 = vset.pattern.permute.xlu0 0
          %552 = vperm.xlu0 %551, %v545
          %v553 = vpop.permute.xlu0 %552
          %v555 = vsel %vm549, %v553, 0.0
          %v556 = vadd.f32 %v555, 0.0
          %557 = vset.pattern.permute.xlu0 1
          %558 = vperm.xlu0 %557, %v529
          %v559 = vpop.permute.xlu0 %558
          %vm560 = vcmp.eq.s32.totalorder %v312, %v559
          %561 = vset.pattern.permute.xlu0 1
          %562 = vperm.xlu0 %561, %v545
          %v563 = vpop.permute.xlu0 %562
          %v565 = vsel %vm560, %v563, 0.0
          %v566 = vadd.f32 %v556, %v565
          %567 = vset.pattern.permute.xlu0 2
          %568 = vperm.xlu0 %567, %v529
          %v569 = vpop.permute.xlu0 %568
          %vm570 = vcmp.eq.s32.totalorder %v312, %v569
          %571 = vset.pattern.permute.xlu0 2
          %572 = vperm.xlu0 %571, %v545
          %v573 = vpop.permute.xlu0 %572
          %v575 = vsel %vm570, %v573, 0.0
          %v576 = vadd.f32 %v566, %v575
          %577 = vset.pattern.permute.xlu0 3
          %578 = vperm.xlu0 %577, %v529
          %v579 = vpop.permute.xlu0 %578
          %vm580 = vcmp.eq.s32.totalorder %v312, %v579
          %581 = vset.pattern.permute.xlu0 3
          %582 = vperm.xlu0 %581, %v545
          %v583 = vpop.permute.xlu0 %582
          %v585 = vsel %vm580, %v583, 0.0
          %v586 = vadd.f32 %v576, %v585
          %587 = vset.pattern.permute.xlu0 4
          %588 = vperm.xlu0 %587, %v529
          %v589 = vpop.permute.xlu0 %588
          %vm590 = vcmp.eq.s32.totalorder %v312, %v589
          %591 = vset.pattern.permute.xlu0 4
          %592 = vperm.xlu0 %591, %v545
          %v593 = vpop.permute.xlu0 %592
          %v595 = vsel %vm590, %v593, 0.0
          %v596 = vadd.f32 %v586, %v595
          %597 = vset.pattern.permute.xlu0 5
          %598 = vperm.xlu0 %597, %v529
          %v599 = vpop.permute.xlu0 %598
          %vm600 = vcmp.eq.s32.totalorder %v312, %v599
          %601 = vset.pattern.permute.xlu0 5
          %602 = vperm.xlu0 %601, %v545
          %v603 = vpop.permute.xlu0 %602
          %v605 = vsel %vm600, %v603, 0.0
          %v606 = vadd.f32 %v596, %v605
          %607 = vset.pattern.permute.xlu0 6
          %608 = vperm.xlu0 %607, %v529
          %v609 = vpop.permute.xlu0 %608
          %vm610 = vcmp.eq.s32.totalorder %v312, %v609
          %611 = vset.pattern.permute.xlu0 6
          %612 = vperm.xlu0 %611, %v545
          %v613 = vpop.permute.xlu0 %612
          %v615 = vsel %vm610, %v613, 0.0
          %v616 = vadd.f32 %v606, %v615
          %617 = vset.pattern.permute.xlu0 7
          %618 = vperm.xlu0 %617, %v529
          %v619 = vpop.permute.xlu0 %618
          %vm620 = vcmp.eq.s32.totalorder %v312, %v619
          %621 = vset.pattern.permute.xlu0 7
          %622 = vperm.xlu0 %621, %v545
          %v623 = vpop.permute.xlu0 %622
          %v625 = vsel %vm620, %v623, 0.0
          %v626 = vadd.f32 %v616, %v625
          %627 = vset.pattern.permute.xlu0 8
          %628 = vperm.xlu0 %627, %v529
          %v629 = vpop.permute.xlu0 %628
          %vm630 = vcmp.eq.s32.totalorder %v312, %v629
          %631 = vset.pattern.permute.xlu0 8
          %632 = vperm.xlu0 %631, %v545
          %v633 = vpop.permute.xlu0 %632
          %v635 = vsel %vm630, %v633, 0.0
          %v636 = vadd.f32 %v626, %v635
          %637 = vset.pattern.permute.xlu0 9
          %638 = vperm.xlu0 %637, %v529
          %v639 = vpop.permute.xlu0 %638
          %vm640 = vcmp.eq.s32.totalorder %v312, %v639
          %641 = vset.pattern.permute.xlu0 9
          %642 = vperm.xlu0 %641, %v545
          %v643 = vpop.permute.xlu0 %642
          %v645 = vsel %vm640, %v643, 0.0
          %v646 = vadd.f32 %v636, %v645
          %647 = vst [vmem:[#allocation9] sm:$0xff] %v646
        $region48: #{tpu_custom_call.1} parent=31 // pred_fallthru
          _
        // Predicated region
        $region49: #{tpu_custom_call.1} parent=31 // pred_check
          %p648 = pneg %p127
        $region50: #{tpu_custom_call.1} parent=31 // pred_check_branch
          %650 = sbr.rel (%p648) target = $region52
        $region51: #{tpu_custom_call.1} parent=31 // pred_region
          %s652 = ssub.s32 128, 128
          %653 = vsyncadd [#allocation6], %s652
          %s654 = smul.addr %s23, 128
          %s655 = scalar_lea.hbm %s3, %s654
          %s657 = sshll.u32 [#allocation9], 4
          %s658 = int_to_ptr.vmem [resolvable:$true] %s657
          %660 = dma.vmem_to_hbm [thread:$0]  %s658, 128, %s655, [#allocation6]
        $region52: #{tpu_custom_call.1} parent=31 // pred_fallthru
          _
        // Predicated region
        $region53: #{tpu_custom_call.1} parent=31 // pred_check
          %p661 = pneg %p127
        $region54: #{tpu_custom_call.1} parent=31 // pred_check_branch
          %663 = sbr.rel (%p661) target = $region56
        $region55: #{tpu_custom_call.1} parent=31 // pred_region
          %664 = dma.done [#allocation6], 128
        $region56: #{tpu_custom_call.1} parent=31 // pred_fallthru
          _
      $region32: #{tpu_custom_call.1} parent=5 // pred_fallthru
        _
      %p665 = scmp.le.s32.totalorder 2, %s14
      // Predicated region
      $region57: #{tpu_custom_call.1} parent=5 // pred_check
        %p666 = pneg %p665
      $region58: #{tpu_custom_call.1} parent=5 // pred_check_branch
        %668 = sbr.rel (%p666) target = $region60
      $region59: #{tpu_custom_call.1} parent=5 // pred_region
        %s669 = ssub.s32 %s14, 2
      $region60: #{tpu_custom_call.1} parent=5 // pred_fallthru
        _
    $region6: #{tpu_custom_call.1} parent=1 // loop_footer
      %s18 = sadd.s32 1, %s14
    $region7: #{tpu_custom_call.1} parent=1 // loop_footer_branch
      %13 = sbr.rel target = $region3
    $region8: #{tpu_custom_call.1} parent=1 // loop_exit
      _
    %670 = vsyncpa [#allocation5], 1
    %s671 = scalar_lea.sflag [#allocation5], 1
    %672 = vsyncpa %s671, 1
    %673 = vsyncpa [#allocation8], 1
    %s674 = scalar_lea.sflag [#allocation8], 1
    %675 = vsyncpa %s674, 1
    %676 = vsyncpa [#allocation6], 1
    %s677 = scalar_lea.sflag [#allocation6], 1
    %678 = vsyncpa %s677, 1

</llo_original>
